<compile_context>
chip_gen: v7x
topology: tpu7x:2x2x1
jax: 0.10.0
libtpu: 0.0.40
codegen_flags: <defaults>
</compile_context>

<pallas_src>
import math
import functools

import jax
import jax.numpy as jnp
from jax.experimental import pallas as pl
from jax.experimental.pallas import tpu as pltpu

_LANE = 128


def _cce_kernel(x_ref, t_ref, o_ref, m_sc, l_sc, xt_sc, *,
                clamping, log_pmin, n_rows, tm, tc):
    """Row tile x class chunk: online logsumexp + fused target gather."""
    i = pl.program_id(0)
    j = pl.program_id(1)

    @pl.when(j == 0)
    def _():
        m_sc[...] = jnp.full_like(m_sc, -jnp.inf)
        l_sc[...] = jnp.zeros_like(l_sc)
        xt_sc[...] = jnp.zeros_like(xt_sc)

    x = x_ref[...].astype(jnp.float32)                               # (tm, tc)

    # Online max / sum-exp update.  No full-width validity mask on x: garbage
    # tail rows only corrupt their own per-row scratch entries and are masked
    # by the final select (which does not propagate NaN/Inf).
    m_prev = m_sc[...]                                               # (tm, 1)
    m_new = jnp.maximum(m_prev, jnp.max(x, axis=1, keepdims=True))   # (tm, 1)
    l_sc[...] = (l_sc[...] * jnp.exp(m_prev - m_new)
                 + jnp.sum(jnp.exp(x - m_new), axis=1, keepdims=True))
    m_sc[...] = m_new
    # TODO(synk): optional bf16 exp / MXU ones-matvec reduce if EUP/VALU bind on v7x.

    # Fused gather of the target logit from RAW x (independent of the max
    # chain); class iota is a (1, tc) row that broadcasts in the compare.
    cls = jax.lax.broadcasted_iota(jnp.int32, (1, tc), 1) + j * tc   # (1, tc)
    tgt = t_ref[...]                                                 # (tm, 1)
    xt_sc[...] += jnp.sum(jnp.where(cls == tgt, x, 0.0),
                          axis=1, keepdims=True)                     # (tm, 1)

    @pl.when(j == pl.num_programs(1) - 1)
    def _():
        lse = m_sc[...] + jnp.log(l_sc[...])                         # logsumexp(x)
        logp_t = xt_sc[...] - lse                                    # log_softmax at target
        if clamping:
            # Clamping full log-softmax then gathering == clamping the gathered entry.
            logp_t = jnp.maximum(logp_t, jnp.float32(log_pmin))
        row_ids = jax.lax.broadcasted_iota(jnp.int32, (tm, 1), 0) + i * tm
        nll = jnp.where(row_ids < n_rows, -logp_t, 0.0)              # mask tail rows
        # Lane-dense, per-tile output block (no serial accumulator -> "parallel" rows).
        o_ref[...] = jnp.zeros(o_ref.shape, jnp.float32) + jnp.sum(nll)


def clamped_cross_entropy(x, target, *, clamping=False, pmin=1e-5,
                          reduction='mean', class_tile=None):
    """JAX/Pallas equivalent of ClampedCrossEntropyLoss.forward(x, target)."""
    if reduction not in ('mean', 'sum'):
        # TODO(synk): reduction='none' (per-sample loss vector output) not implemented.
        raise NotImplementedError("only 'mean' and 'sum' reductions are supported")

    N, C = x.shape
    itemsize = jnp.dtype(x.dtype).itemsize
    # Sublane packing of the input dtype: 8 (f32), 16 (bf16), 32 (i8/fp8).
    pack = max(8, 32 // itemsize)

    t = target.astype(jnp.int32)

    # ---- class-dim tiling / padding ------------------------------------
    if class_tile is not None:
        tc_req = max(_LANE, (int(class_tile) // _LANE) * _LANE)
    elif C > 8192:
        tc_req = 2048            # vocab-scale C: chunk with online logsumexp
    else:
        tc_req = None            # single chunk

    if tc_req is None or tc_req >= C:
        # Single class chunk; pad to a lane multiple only for large ragged C.
        Cp = -(-C // _LANE) * _LANE if (C > _LANE and C % _LANE != 0) else C
        tc = Cp
    else:
        tc = tc_req
        Cp = -(-C // tc) * tc
    num_class_tiles = Cp // tc

    if Cp != C:
        # Pad classes with a LARGE NEGATIVE (never 0): exp underflows to 0 so
        # logsumexp is exact, and padded class ids never match a target.
        neg = (jnp.finfo(x.dtype).min if jnp.issubdtype(x.dtype, jnp.floating)
               else jnp.iinfo(x.dtype).min)
        x = jnp.pad(x, ((0, 0), (0, Cp - C)), constant_values=neg)

    # ---- row padding (tiny batches) -------------------------------------
    if N < pack:
        pad = pack - N
        x = jnp.pad(x, ((0, pad), (0, 0)))
        t = jnp.pad(t, (0, pad))
        n_padded = pack
    else:
        n_padded = N

    # ---- row tile --------------------------------------------------------
    # ~2 MiB f32 per (tm, tc) copy: a few live temporaries + double-buffered
    # input stay well under the 32 MiB scoped VMEM limit (safe on v7x 64 MiB/TC).
    budget_rows = max(pack, (2 * 1024 * 1024) // (4 * tc))
    tm = min(budget_rows, 1024, n_padded)
    if n_padded > pack:
        # Guarantee >= 2 row tiles so the "parallel" axis shards across both
        # v7x TensorCores (per-step overhead ~0.35 us is negligible).
        half = -(-n_padded // 2)
        half = -(-half // pack) * pack
        tm = min(tm, half)
    tm = max(pack, (tm // pack) * pack)
    grid_m = pl.cdiv(n_padded, tm)

    t2 = t.reshape(n_padded, 1)

    kernel = functools.partial(
        _cce_kernel,
        clamping=clamping,
        log_pmin=math.log(pmin),
        n_rows=N,
        tm=tm,
        tc=tc,
    )

    cost = pl.CostEstimate(
        flops=5 * n_padded * Cp,
        transcendentals=n_padded * Cp + 2 * n_padded * num_class_tiles,
        bytes_accessed=n_padded * Cp * itemsize + n_padded * 4 + grid_m * 8 * 128 * 4,
    )

    partials = pl.pallas_call(
        kernel,
        out_shape=jax.ShapeDtypeStruct((grid_m, 8, 128), jnp.float32),
        grid_spec=pltpu.PrefetchScalarGridSpec(
            num_scalar_prefetch=0,
            grid=(grid_m, num_class_tiles),
            in_specs=[
                pl.BlockSpec((tm, tc), lambda i, j: (i, j)),   # logits chunk
                pl.BlockSpec((tm, 1), lambda i, j: (i, 0)),    # targets tile
            ],
            out_specs=pl.BlockSpec((1, 8, 128), lambda i, j: (i, 0, 0)),
            scratch_shapes=[
                pltpu.VMEM((tm, 1), jnp.float32),   # running max m
                pltpu.VMEM((tm, 1), jnp.float32),   # running sum-exp l
                pltpu.VMEM((tm, 1), jnp.float32),   # gathered target logit
            ],
        ),
        compiler_params=pltpu.CompilerParams(
            # row tiles independent (v7x 2-TC friendly); class axis is the reduction
            dimension_semantics=("parallel", "arbitrary"),
            vmem_limit_bytes=32 * 1024 * 1024,   # live set ~12 MiB after trimming
        ),
        cost_estimate=cost,
    )(x, t2)

    total = jnp.sum(partials[:, 0, 0])
    if reduction == 'mean':
        total = total / jnp.float32(N)
    return total.astype(x.dtype)


def _reference(x, target, clamping, pmin, reduction):
    logp = jax.nn.log_softmax(x.astype(jnp.float32), axis=1)
    if clamping:
        logp = jnp.maximum(logp, math.log(pmin))
    nll = -jnp.take_along_axis(logp, target.astype(jnp.int32)[:, None], axis=1)[:, 0]
    return jnp.mean(nll) if reduction == 'mean' else jnp.sum(nll)


if __name__ == "__main__":
    key = jax.random.PRNGKey(0)

    # (N, C, forced class_tile): small single-chunk, ragged rows + ragged
    # classes (C padded to 384), and forced class-dim chunking (online lse).
    configs = [
        (16, 32, None),
        (37, 300, None),
        (40, 512, 128),
    ]

    ok = True
    for idx, (N, C, ct) in enumerate(configs):
        k1, k2 = jax.random.split(jax.random.fold_in(key, idx))
        x = jax.random.normal(k1, (N, C), dtype=jnp.float32) * 3.0
        target = jax.random.randint(k2, (N,), 0, C, dtype=jnp.int32)
        for clamping in (False, True):
            for reduction in ('mean', 'sum'):
                got = clamped_cross_entropy(x, target, clamping=clamping,
                                            pmin=1e-5, reduction=reduction,
                                            class_tile=ct)
                got = jax.block_until_ready(got)
                want = _reference(x, target, clamping, 1e-5, reduction)
                if not jnp.allclose(got, want, rtol=1e-5, atol=1e-4):
                    ok = False
                    print(f"MISMATCH N={N} C={C} ct={ct} clamping={clamping} "
                          f"reduction={reduction}: {got} vs {want}")

    if ok:
        print("KERNEL_OK")
</pallas_src>

<mosaic_0001>
module attributes {stable_mosaic.version = 11 : i64} {
  func.func @_cce_kernel(%arg0: i32, %arg1: i32, %arg2: memref<8x32xf32, #tpu.memory_space<vmem>>, %arg3: memref<8x1xi32, #tpu.memory_space<vmem>>, %arg4: memref<1x8x128xf32, #tpu.memory_space<vmem>>, %arg5: memref<8x1xf32, #tpu.memory_space<vmem>>, %arg6: memref<8x1xf32, #tpu.memory_space<vmem>>, %arg7: memref<8x1xf32, #tpu.memory_space<vmem>>) attributes {dimension_semantics = [#tpu.dimension_semantics<parallel>, #tpu.dimension_semantics<arbitrary>], iteration_bounds = array<i64: 2, 1>, scalar_prefetch = 0 : i64, scratch_operands = 3 : i64, tpu.core_type = #tpu.core_type<tc>, window_params = [{transform_indices = @transform_0, window_bounds = array<i64: 8, 32>}, {transform_indices = @transform_1, window_bounds = array<i64: 8, 1>}, {transform_indices = @transform_2, window_bounds = array<i64: 1, 8, 128>}]} {
    %c0_i32 = arith.constant 0 : i32
    %0 = arith.cmpi eq, %arg1, %c0_i32 : i32
    %1 = arith.extui %0 : i1 to i32
    %c0_i32_0 = arith.constant 0 : i32
    %2 = arith.cmpi ne, %1, %c0_i32_0 : i32
    scf.if %2 {
      %cst_21 = arith.constant 0xFF800000 : f32
      %38 = vector.broadcast %cst_21 : f32 to vector<8x1xf32>
      %c0_22 = arith.constant 0 : index
      %c0_23 = arith.constant 0 : index
      %39 = vector.load %arg5[%c0_22, %c0_23] : memref<8x1xf32, #tpu.memory_space<vmem>>, vector<8x1xf32>
      tpu.vector_store %arg5[%c0_22, %c0_23], %38 {strides = array<i32>} : memref<8x1xf32, #tpu.memory_space<vmem>>, vector<8x1xf32>,
      %cst_24 = arith.constant 0.000000e+00 : f32
      %40 = vector.broadcast %cst_24 : f32 to vector<8x1xf32>
      %c0_25 = arith.constant 0 : index
      %c0_26 = arith.constant 0 : index
      %41 = vector.load %arg6[%c0_25, %c0_26] : memref<8x1xf32, #tpu.memory_space<vmem>>, vector<8x1xf32>
      tpu.vector_store %arg6[%c0_25, %c0_26], %40 {strides = array<i32>} : memref<8x1xf32, #tpu.memory_space<vmem>>, vector<8x1xf32>,
      %cst_27 = arith.constant 0.000000e+00 : f32
      %42 = vector.broadcast %cst_27 : f32 to vector<8x1xf32>
      %c0_28 = arith.constant 0 : index
      %c0_29 = arith.constant 0 : index
      %43 = vector.load %arg7[%c0_28, %c0_29] : memref<8x1xf32, #tpu.memory_space<vmem>>, vector<8x1xf32>
      tpu.vector_store %arg7[%c0_28, %c0_29], %42 {strides = array<i32>} : memref<8x1xf32, #tpu.memory_space<vmem>>, vector<8x1xf32>,
    } else {
    }
    %c0 = arith.constant 0 : index
    %c0_1 = arith.constant 0 : index
    %3 = vector.load %arg2[%c0, %c0_1] : memref<8x32xf32, #tpu.memory_space<vmem>>, vector<8x32xf32>
    %c0_2 = arith.constant 0 : index
    %c0_3 = arith.constant 0 : index
    %4 = vector.load %arg5[%c0_2, %c0_3] : memref<8x1xf32, #tpu.memory_space<vmem>>, vector<8x1xf32>
    %cst = arith.constant dense<0xFF800000> : vector<8xf32>
    %5 = vector.multi_reduction <maximumf>, %3, %cst [1] : vector<8x32xf32> to vector<8xf32>
    %6 = vector.shape_cast %5 : vector<8xf32> to vector<8x1xf32>
    %7 = arith.maximumf %4, %6 : vector<8x1xf32>
    %c0_4 = arith.constant 0 : index
    %c0_5 = arith.constant 0 : index
    %8 = vector.load %arg6[%c0_4, %c0_5] : memref<8x1xf32, #tpu.memory_space<vmem>>, vector<8x1xf32>
    %9 = arith.subf %4, %7 : vector<8x1xf32>
    %10 = math.exp %9 : vector<8x1xf32>
    %11 = arith.mulf %8, %10 : vector<8x1xf32>
    %12 = vector.broadcast %7 : vector<8x1xf32> to vector<8x32xf32>
    %13 = arith.subf %3, %12 : vector<8x32xf32>
    %14 = math.exp %13 : vector<8x32xf32>
    %cst_6 = arith.constant dense<0.000000e+00> : vector<8xf32>
    %15 = vector.multi_reduction <add>, %14, %cst_6 [1] : vector<8x32xf32> to vector<8xf32>
    %16 = vector.shape_cast %15 : vector<8xf32> to vector<8x1xf32>
    %17 = arith.addf %11, %16 : vector<8x1xf32>
    %c0_7 = arith.constant 0 : index
    %c0_8 = arith.constant 0 : index
    %18 = vector.load %arg6[%c0_7, %c0_8] : memref<8x1xf32, #tpu.memory_space<vmem>>, vector<8x1xf32>
    tpu.vector_store %arg6[%c0_7, %c0_8], %17 {strides = array<i32>} : memref<8x1xf32, #tpu.memory_space<vmem>>, vector<8x1xf32>,
    %c0_9 = arith.constant 0 : index
    %c0_10 = arith.constant 0 : index
    %19 = vector.load %arg5[%c0_9, %c0_10] : memref<8x1xf32, #tpu.memory_space<vmem>>, vector<8x1xf32>
    tpu.vector_store %arg5[%c0_9, %c0_10], %7 {strides = array<i32>} : memref<8x1xf32, #tpu.memory_space<vmem>>, vector<8x1xf32>,
    %20 = tpu.iota {dimensions = array<i32: 1>} : vector<1x32xi32>
    %c32_i32 = arith.constant 32 : i32
    %21 = arith.muli %arg1, %c32_i32 : i32
    %22 = vector.broadcast %21 : i32 to vector<1x32xi32>
    %23 = arith.addi %20, %22 : vector<1x32xi32>
    %c0_11 = arith.constant 0 : index
    %c0_12 = arith.constant 0 : index
    %24 = vector.load %arg3[%c0_11, %c0_12] : memref<8x1xi32, #tpu.memory_space<vmem>>, vector<8x1xi32>
    %c0_13 = arith.constant 0 : index
    %c0_14 = arith.constant 0 : index
    %25 = vector.load %arg7[%c0_13, %c0_14] : memref<8x1xf32, #tpu.memory_space<vmem>>, vector<8x1xf32>
    %26 = vector.broadcast %23 : vector<1x32xi32> to vector<8x32xi32>
    %27 = vector.broadcast %24 : vector<8x1xi32> to vector<8x32xi32>
    %28 = arith.cmpi eq, %26, %27 : vector<8x32xi32>
    %cst_15 = arith.constant 0.000000e+00 : f32
    %29 = vector.broadcast %cst_15 : f32 to vector<8x32xf32>
    %30 = arith.select %28, %3, %29 : vector<8x32xi1>, vector<8x32xf32>
    %cst_16 = arith.constant dense<0.000000e+00> : vector<8xf32>
    %31 = vector.multi_reduction <add>, %30, %cst_16 [1] : vector<8x32xf32> to vector<8xf32>
    %32 = vector.shape_cast %31 : vector<8xf32> to vector<8x1xf32>
    %33 = arith.addf %25, %32 : vector<8x1xf32>
    %c0_17 = arith.constant 0 : index
    %c0_18 = arith.constant 0 : index
    %34 = vector.load %arg7[%c0_17, %c0_18] : memref<8x1xf32, #tpu.memory_space<vmem>>, vector<8x1xf32>
    tpu.vector_store %arg7[%c0_17, %c0_18], %33 {strides = array<i32>} : memref<8x1xf32, #tpu.memory_space<vmem>>, vector<8x1xf32>,
    %c0_i32_19 = arith.constant 0 : i32
    %35 = arith.cmpi eq, %arg1, %c0_i32_19 : i32
    %36 = arith.extui %35 : i1 to i32
    %c0_i32_20 = arith.constant 0 : i32
    %37 = arith.cmpi ne, %36, %c0_i32_20 : i32
    scf.if %37 {
      %c0_21 = arith.constant 0 : index
      %c0_22 = arith.constant 0 : index
      %38 = vector.load %arg5[%c0_21, %c0_22] : memref<8x1xf32, #tpu.memory_space<vmem>>, vector<8x1xf32>
      %c0_23 = arith.constant 0 : index
      %c0_24 = arith.constant 0 : index
      %39 = vector.load %arg6[%c0_23, %c0_24] : memref<8x1xf32, #tpu.memory_space<vmem>>, vector<8x1xf32>
      %40 = math.log %39 : vector<8x1xf32>
      %41 = arith.addf %38, %40 : vector<8x1xf32>
      %c0_25 = arith.constant 0 : index
      %c0_26 = arith.constant 0 : index
      %42 = vector.load %arg7[%c0_25, %c0_26] : memref<8x1xf32, #tpu.memory_space<vmem>>, vector<8x1xf32>
      %43 = arith.subf %42, %41 : vector<8x1xf32>
      %44 = tpu.iota {dimensions = array<i32: 0>} : vector<8x1xi32>
      %c8_i32 = arith.constant 8 : i32
      %45 = arith.muli %arg0, %c8_i32 : i32
      %46 = vector.broadcast %45 : i32 to vector<8x1xi32>
      %47 = arith.addi %44, %46 : vector<8x1xi32>
      %c16_i32 = arith.constant 16 : i32
      %48 = vector.broadcast %c16_i32 : i32 to vector<8x1xi32>
      %49 = arith.cmpi slt, %47, %48 : vector<8x1xi32>
      %cst_27 = arith.constant 0.000000e+00 : f32
      %50 = vector.broadcast %cst_27 : f32 to vector<8x1xf32>
      %51 = arith.subf %50, %43 : vector<8x1xf32>
      %cst_28 = arith.constant 0.000000e+00 : f32
      %52 = vector.broadcast %cst_28 : f32 to vector<8x1xf32>
      %53 = arith.select %49, %51, %52 : vector<8x1xi1>, vector<8x1xf32>
      %cst_29 = arith.constant 0.000000e+00 : f32
      %54 = vector.broadcast %cst_29 : f32 to vector<1x8x128xf32>
      %55 = vector.shape_cast %53 : vector<8x1xf32> to vector<1x8x1xf32>
      %cst_30 = arith.constant dense<0.000000e+00> : vector<1xf32>
      %56 = vector.multi_reduction <add>, %55, %cst_30 [1, 2] : vector<1x8x1xf32> to vector<1xf32>
      %57 = vector.shape_cast %56 : vector<1xf32> to vector<1x1x1xf32>
      %58 = vector.extract %57[0, 0, 0] : f32 from vector<1x1x1xf32>
      %59 = vector.broadcast %58 : f32 to vector<1x8x128xf32>
      %60 = arith.addf %54, %59 : vector<1x8x128xf32>
      %c0_31 = arith.constant 0 : index
      %c0_32 = arith.constant 0 : index
      %c0_33 = arith.constant 0 : index
      %61 = vector.load %arg4[%c0_31, %c0_32, %c0_33] : memref<1x8x128xf32, #tpu.memory_space<vmem>>, vector<1x8x128xf32>
      tpu.vector_store %arg4[%c0_31, %c0_32, %c0_33], %60 {strides = array<i32>} : memref<1x8x128xf32, #tpu.memory_space<vmem>>, vector<1x8x128xf32>,
    } else {
    }
    return
  }
  func.func @transform_0(%arg0: i32, %arg1: i32) -> (i32, i32) {
    %c0_i32 = arith.constant 0 : i32
    return %arg0, %arg1 : i32, i32
  }
  func.func @transform_1(%arg0: i32, %arg1: i32) -> (i32, i32) {
    %c0_i32 = arith.constant 0 : i32
    %c0_i32_0 = arith.constant 0 : i32
    return %arg0, %c0_i32 : i32, i32
  }
  func.func @transform_2(%arg0: i32, %arg1: i32) -> (i32, i32, i32) {
    %c0_i32 = arith.constant 0 : i32
    %c0_i32_0 = arith.constant 0 : i32
    %c0_i32_1 = arith.constant 0 : i32
    return %arg0, %c0_i32, %c0_i32_0 : i32, i32, i32
  }
}

</mosaic_0001>

<llo_original>
// kernel: tpu_custom_call.1
$region0: #{tpu_custom_call.1}
  #allocation0 [shape = 'u32[]', space=smem, size = 0x4, offset = 0x4, fixed_abs, tag = 'smem constant byte address 0x4 - core index']
  #allocation1 [shape = 'u32[144,128]{1,0:T(1,128)}', space=vmem, size = 0x12000, scoped, tag = 'internal scratch']
  #allocation2 [shape = 'f32[8,1]{1,0:T(8,128)}', space=vmem, size = 0x1000, scoped, tag = 'scratch operand']
  #allocation3 [shape = 'f32[8,1]{1,0:T(8,128)}', space=vmem, size = 0x1000, scoped, tag = 'scratch operand']
  #allocation4 [shape = 'f32[8,1]{1,0:T(8,128)}', space=vmem, size = 0x1000, scoped, tag = 'scratch operand']
  %s0 = inlined_call_operand.vmem [shape: f32[16,32], index: 0, kind: input, shape index: {}]
  %s1 = inlined_call_operand.vmem [shape: s32[16,1], index: 1, kind: input, shape index: {}]
  %s2 = inlined_call_operand.hbm [shape: f32[2,8,128], index: 2, kind: output, shape index: {}]
  %s3 = sld [smem:[#allocation0]]
  $region49: #{tpu_custom_call.1} parent=0
    _
  %s5 = ssub.s32 1, %s3
  %s6 = scalar_select 0, %s5, %s3
  $region1: #{tpu_custom_call.1} parent=0
    #allocation5 [shape = 'u8[8192]{0}', space=vmem, size = 0x2000, scoped, tag = 'output window, operand 0']
    #allocation6 [shape = 's32[2]{0}', space=sflag, size = 0x8, scoped, tag = 'scoped memory for tpu_custom_call.1']
    %7 = vsyncpa [#allocation6], 0
    %s8 = scalar_lea.sflag [#allocation6], 1
    %9 = vsyncpa %s8, 0
    loop: start=0, step=1, limit=4
    $region2: #{tpu_custom_call.1} parent=1 // loop_pre_header
      _
    $region3: #{tpu_custom_call.1} parent=1 // loop_header
      %s11 = sphi 0, %s15
      %p12 = scmp.ge.s32.totalorder %s11, 4
      %s18 = sphi 0, %s30
      %s19 = sphi 0, %s26
      %s20 = sphi 0, %s18
      %s21 = sphi 0, %s19
      %s22 = sphi 0, %s20
      %s23 = sphi 0, %s21
      %s35 = sphi 0, %s37
      %s38 = sphi 0, %s35
      %s39 = sphi 0, %s38
      %s55 = sphi 0, %s39
      %s61 = sphi 0, %s63
      %s64 = sphi 0, %s61
      %s65 = sphi 0, %s64
      %s81 = sphi 0, %s65
      %s87 = sphi 0, %s89
      %s90 = sphi 0, %s87
      %s91 = sphi 0, %s90
      %s107 = sphi 0, %s91
    $region4: #{tpu_custom_call.1} parent=1 // loop_header_branch
      %14 = sbr.rel (%p12) target = $region8
    $region5: #{tpu_custom_call.1} parent=1 // loop_body
      %s16 = ssub.s32 %s11, 1
      %s17 = ssub.s32 %s11, 2
      %s24 = sadd.s32 1, %s19
      %p25 = scmp.ge.s32.totalorder %s24, 1
      %s26 = scalar_select %p25, 0, %s24
      %s27 = sadd.s32 1, %s18
      %s28 = scalar_select %p25, %s27, %s18
      %p29 = scmp.ge.s32.totalorder %s28, 2
      %s30 = scalar_select %p29, 0, %s28
      %s31 = ssub.s32 %s18, %s30
      %s32 = ssub.s32 %s19, %s26
      %s33 = sor.u32 %s31, %s32
      %p34 = scmp.eq.s32.totalorder %s33, 0
      %s36 = sadd.s32 %s35, 1
      %s37 = scalar_select %p34, %s35, %s36
      %p40 = pneg %p34
      %p41 = scmp.eq.s32.totalorder %s11, 1
      %p42 = por %p40, %p41
      %p43 = scmp.ne.s32.totalorder %s35, %s38
      %p44 = scmp.eq.s32.totalorder %s11, 0
      %p45 = por %p43, %p44
      %p46 = scmp.ne.s32.totalorder %s35, %s38
      %p47 = scmp.eq.s32.totalorder %s16, 1
      %p48 = por %p46, %p47
      %p49 = scmp.ne.s32.totalorder %s38, %s39
      %p50 = scmp.eq.s32.totalorder %s16, 0
      %p51 = por %p49, %p50
      %p52 = scmp.ne.s32.totalorder %s38, %s39
      %p53 = scmp.eq.s32.totalorder %s17, 1
      %p54 = por %p52, %p53
      %p56 = scmp.ne.s32.totalorder %s39, %s55
      %p57 = scmp.eq.s32.totalorder %s17, 0
      %p58 = por %p56, %p57
      %s59 = ssub.s32 %s18, %s30
      %p60 = scmp.eq.s32.totalorder %s59, 0
      %s62 = sadd.s32 %s61, 1
      %s63 = scalar_select %p60, %s61, %s62
      %p66 = pneg %p60
      %p67 = scmp.eq.s32.totalorder %s11, 1
      %p68 = por %p66, %p67
      %p69 = scmp.ne.s32.totalorder %s61, %s64
      %p70 = scmp.eq.s32.totalorder %s11, 0
      %p71 = por %p69, %p70
      %p72 = scmp.ne.s32.totalorder %s61, %s64
      %p73 = scmp.eq.s32.totalorder %s16, 1
      %p74 = por %p72, %p73
      %p75 = scmp.ne.s32.totalorder %s64, %s65
      %p76 = scmp.eq.s32.totalorder %s16, 0
      %p77 = por %p75, %p76
      %p78 = scmp.ne.s32.totalorder %s64, %s65
      %p79 = scmp.eq.s32.totalorder %s17, 1
      %p80 = por %p78, %p79
      %p82 = scmp.ne.s32.totalorder %s65, %s81
      %p83 = scmp.eq.s32.totalorder %s17, 0
      %p84 = por %p82, %p83
      %s85 = ssub.s32 %s18, %s30
      %p86 = scmp.eq.s32.totalorder %s85, 0
      %s88 = sadd.s32 %s87, 1
      %s89 = scalar_select %p86, %s87, %s88
      %p92 = pneg %p86
      %p93 = scmp.eq.s32.totalorder %s11, 1
      %p94 = por %p92, %p93
      %p95 = scmp.ne.s32.totalorder %s87, %s90
      %p96 = scmp.eq.s32.totalorder %s11, 0
      %p97 = por %p95, %p96
      %p98 = scmp.ne.s32.totalorder %s87, %s90
      %p99 = scmp.eq.s32.totalorder %s16, 1
      %p100 = por %p98, %p99
      %p101 = scmp.ne.s32.totalorder %s90, %s91
      %p102 = scmp.eq.s32.totalorder %s16, 0
      %p103 = por %p101, %p102
      %p104 = scmp.ne.s32.totalorder %s90, %s91
      %p105 = scmp.eq.s32.totalorder %s17, 1
      %p106 = por %p104, %p105
      %p108 = scmp.ne.s32.totalorder %s91, %s107
      %p109 = scmp.eq.s32.totalorder %s17, 0
      %p110 = por %p108, %p109
      %p111 = scmp.le.s32.totalorder 1, %s11
      %p112 = scmp.lt.s32.totalorder %s11, 3
      %p113 = pnand %p111, %p112
      %p114 = pneg %p113
      // Predicated region
      $region9: #{tpu_custom_call.1} parent=5 // pred_check
        _
      $region10: #{tpu_custom_call.1} parent=5 // pred_check_branch
        %116 = sbr.rel (%p113) target = $region12
      $region11: #{tpu_custom_call.1} parent=5 // pred_region
        %s117 = ssub.s32 %s11, 1
      $region12: #{tpu_custom_call.1} parent=5 // pred_fallthru
        _
      %p118 = scmp.lt.s32.totalorder %s11, 2
      // Predicated region
      $region13: #{tpu_custom_call.1} parent=5 // pred_check
        %p119 = pneg %p118
      $region14: #{tpu_custom_call.1} parent=5 // pred_check_branch
        %121 = sbr.rel (%p119) target = $region16
      $region15: #{tpu_custom_call.1} parent=5 // pred_region
        // Predicated region
        $region17: #{tpu_custom_call.1} parent=15 // pred_check
          %p122 = pneg %p45
        $region18: #{tpu_custom_call.1} parent=15 // pred_check_branch
          %124 = sbr.rel (%p122) target = $region20
        $region19: #{tpu_custom_call.1} parent=15 // pred_region
          %p125 = scmp.lt.s32.totalorder %s18, 1
          %s126 = scalar_select %p125, %s18, 1
          %p127 = scmp.lt.s32.totalorder %s19, 0
          %s128 = scalar_select %p127, %s19, 0
          %s129 = sadd.s32 %s128, %s126
          %s130 = smul.addr %s129, 8
          %s131 = scalar_lea.vmem %s0, %s130
        $region20: #{tpu_custom_call.1} parent=15 // pred_fallthru
          _
        // Predicated region
        $region21: #{tpu_custom_call.1} parent=15 // pred_check
          %p132 = pneg %p71
        $region22: #{tpu_custom_call.1} parent=15 // pred_check_branch
          %134 = sbr.rel (%p132) target = $region24
        $region23: #{tpu_custom_call.1} parent=15 // pred_region
          %p135 = scmp.lt.s32.totalorder %s18, 1
          %s136 = scalar_select %p135, %s18, 1
          %s137 = smul.addr %s136, 8
          %s138 = scalar_lea.vmem %s1, %s137
        $region24: #{tpu_custom_call.1} parent=15 // pred_fallthru
          _
      $region16: #{tpu_custom_call.1} parent=5 // pred_fallthru
        _
      %p139 = scmp.le.s32.totalorder 1, %s11
      %p140 = scmp.lt.s32.totalorder %s11, 3
      %p141 = pnand %p139, %p140
      %p142 = pneg %p141
      // Predicated region
      $region25: #{tpu_custom_call.1} parent=5 // pred_check
        _
      $region26: #{tpu_custom_call.1} parent=5 // pred_check_branch
        %144 = sbr.rel (%p141) target = $region28
      $region27: #{tpu_custom_call.1} parent=5 // pred_region
        %s145 = ssub.s32 %s11, 1
        %p146 = scmp.lt.s32.totalorder %s20, 1
        %s147 = scalar_select %p146, %s20, 1
        %p148 = scmp.lt.s32.totalorder %s21, 0
        %s149 = scalar_select %p148, %s21, 0
        %s150 = sadd.s32 %s149, %s147
        %s151 = smul.addr %s150, 8
        %s152 = scalar_lea.vmem %s0, %s151
        %p153 = pneg %p51
        %p154 = pneg %p48
        %p155 = scmp.lt.s32.totalorder %s20, 1
        %s156 = scalar_select %p155, %s20, 1
        %s157 = smul.addr %s156, 8
        %s158 = scalar_lea.vmem %s1, %s157
        %p159 = pneg %p77
        %p160 = pneg %p74
        %p161 = pneg %p103
        %p162 = pneg %p100
        %s163 = sand.u32 %s90, 1
        %s164 = scalar_lea.sflag [#allocation6], %s163
        %s165 = sand.u32 %s90, 1
        %s166 = smul.addr %s165, 8
        %s167 = scalar_lea.vmem [#allocation5], %s166
        %p168 = scmp.lt.s32.totalorder %s20, 1
        %s169 = scalar_select %p168, %s20, 1
        %p170 = scmp.lt.s32.totalorder %s21, 0
        %s171 = scalar_select %p170, %s21, 0
        %s172 = sadd.s32 %s171, %s169
        %s173 = smul.addr %s172, 8
        %s174 = scalar_lea.vmem %s0, %s173
        %p175 = scmp.lt.s32.totalorder %s20, 1
        %s176 = scalar_select %p175, %s20, 1
        %s177 = smul.addr %s176, 8
        %s178 = scalar_lea.vmem %s1, %s177
        %p179 = scmp.eq.s32.totalorder %s21, 0
        // Predicated region
        $region29: #{tpu_custom_call.1} parent=27 // pred_check
          %p180 = pneg %p179
        $region30: #{tpu_custom_call.1} parent=27 // pred_check_branch
          %182 = sbr.rel (%p180) target = $region32
        $region31: #{tpu_custom_call.1} parent=27 // pred_region
          %vm183 = vcmask 7168
          %184 = vst.msk [vmem:[#allocation2] sm:$0xff] %vm183, -inf
          %185 = vst.msk [vmem:[#allocation3] sm:$0xff] %vm183, 0.0
          %186 = vst.msk [vmem:[#allocation4] sm:$0xff] %vm183, 0.0
        $region32: #{tpu_custom_call.1} parent=27 // pred_fallthru
          _
        %v187 = vld [vmem:[%s174] sm:$0xff]
        %v188 = vld [vmem:[#allocation2] sm:$0xff]
        %vm189 = vcmask 261120
        %v190 = vsel %vm189, %v187, -inf
        %191 = vmax.xlane.f32.xlu0 %v190
        %v192 = vpop.xlane.xlu0 %191
        %v193 = vmax.f32 %v188, %v192
        %v194 = vld [vmem:[#allocation3] sm:$0xff]
        %v195 = vsub.f32 %v188, %v193
        %v196 = vmul.f32 %v195, 1.442695
        %v197 = vpow.pop %v196
        %v198 = vmul.f32 %v194, %v197
        %200 = vset.pattern.permute.xlu0 0
        %201 = vperm.xlu0 %200, %v193
        %v202 = vpop.permute.xlu0 %201
        %v204 = vsub.f32 %v187, %v202
        %v205 = vmul.f32 %v204, 1.442695
        %v206 = vpow.pop %v205
        %v207 = vsel %vm189, %v206, 0.0
        %208 = vadd.xlane.f32.xlu0 %v207
        %v209 = vpop.xlane.xlu0 %208
        %v210 = vadd.f32 %v198, %v209
        %vm211 = vcmask 7168
        %212 = vst.msk [vmem:[#allocation3] sm:$0xff] %vm211, %v210
        %213 = vst.msk [vmem:[#allocation2] sm:$0xff] %vm211, %v193
        %v214 = vlaneseq
        %v215 = vand.u32 %v214, 127
        %s216 = smul.u32 %s21, 32
        %v217 = vstv %s216
        %v218 = vadd.s32 %v215, %v217
        %v219 = vld [vmem:[%s178] sm:$0xff]
        %v220 = vld [vmem:[#allocation4] sm:$0xff]
        %221 = vset.pattern.permute.xlu0 0
        %222 = vperm.xlu0 %221, %v219
        %v223 = vpop.permute.xlu0 %222
        %vm224 = vcmp.eq.s32.totalorder %v218, %v223
        %v225 = vsel %vm224, %v187, 0.0
        %v226 = vsel %vm189, %v225, 0.0
        %227 = vadd.xlane.f32.xlu0 %v226
        %v228 = vpop.xlane.xlu0 %227
        %v229 = vadd.f32 %v220, %v228
        %230 = vst.msk [vmem:[#allocation4] sm:$0xff] %vm211, %v229
        // Predicated region
        $region33: #{tpu_custom_call.1} parent=27 // pred_check
          %p231 = pneg %p179
        $region34: #{tpu_custom_call.1} parent=27 // pred_check_branch
          %233 = sbr.rel (%p231) target = $region36
        $region35: #{tpu_custom_call.1} parent=27 // pred_region
          %v234 = vld [vmem:[#allocation2] sm:$0xff]
          %v235 = vld [vmem:[#allocation3] sm:$0xff]
          %v236 = vlog2.pop %v235
          %v237 = vmul.f32 %v236, 0.6931472
          %v238 = vadd.f32 %v234, %v237
          %v239 = vld [vmem:[#allocation4] sm:$0xff]
          %v240 = vsub.f32 %v239, %v238
          %v241 = vlaneseq
          %v242 = vshrl.u32 %v241, 7
          %s243 = smul.u32 %s20, 8
          %v244 = vstv %s243
          %v245 = vadd.s32 %v242, %v244
          %vm246 = vcmp.lt.s32.totalorder %v245, 16
          %v247 = vsub.f32 0.0, %v240
          %v248 = vsel %vm246, %v247, 0.0
          %v249 = vsel %vm211, %v248, 0.0
          %250 = vadd.xlane.f32.xlu0 %v249
          %v251 = vpop.xlane.xlu0 %250
          %v252 = vrot.slane %v251, 4
          %v253 = vadd.f32 %v251, %v252
          %v254 = vrot.slane %v253, 2
          %v255 = vadd.f32 %v253, %v254
          %v256 = vrot.slane %v255, 1
          %v257 = vadd.f32 %v255, %v256
          %s258 = vtos %v257
          %v259 = vstv %s258
          %v260 = vadd.f32 %v259, 0.0
          %261 = vst [vmem:[%s167] sm:$0xff] %v260
        $region36: #{tpu_custom_call.1} parent=27 // pred_fallthru
          _
        %s262 = sand.u32 %s90, 1
        %s263 = scalar_lea.sflag [#allocation6], %s262
        %s264 = sand.u32 %s90, 1
        %s265 = smul.addr %s264, 8
        %s266 = scalar_lea.vmem [#allocation5], %s265
        // Predicated region
        $region37: #{tpu_custom_call.1} parent=27 // pred_check
          %p267 = pneg %p100
        $region38: #{tpu_custom_call.1} parent=27 // pred_check_branch
          %269 = sbr.rel (%p267) target = $region40
        $region39: #{tpu_custom_call.1} parent=27 // pred_region
          %s271 = ssub.s32 128, 128
          %272 = vsyncadd %s263, %s271
          %s273 = smul.addr %s20, 128
          %s274 = scalar_lea.hbm %s2, %s273
          %s276 = sshll.u32 %s266, 4
          %s277 = int_to_ptr.vmem [resolvable:$true] %s276
          %279 = dma.vmem_to_hbm [thread:$0]  %s277, 128, %s274, %s263
        $region40: #{tpu_custom_call.1} parent=27 // pred_fallthru
          _
      $region28: #{tpu_custom_call.1} parent=5 // pred_fallthru
        _
      %p280 = scmp.le.s32.totalorder 2, %s11
      // Predicated region
      $region41: #{tpu_custom_call.1} parent=5 // pred_check
        %p281 = pneg %p280
      $region42: #{tpu_custom_call.1} parent=5 // pred_check_branch
        %283 = sbr.rel (%p281) target = $region44
      $region43: #{tpu_custom_call.1} parent=5 // pred_region
        %s284 = ssub.s32 %s11, 2
        // Predicated region
        $region45: #{tpu_custom_call.1} parent=43 // pred_check
          %p285 = pneg %p106
        $region46: #{tpu_custom_call.1} parent=43 // pred_check_branch
          %287 = sbr.rel (%p285) target = $region48
        $region47: #{tpu_custom_call.1} parent=43 // pred_region
          %s288 = sand.u32 %s91, 1
          %s289 = scalar_lea.sflag [#allocation6], %s288
          %s290 = sand.u32 %s91, 1
          %s291 = smul.addr %s290, 8
          %s292 = scalar_lea.vmem [#allocation5], %s291
          %293 = dma.done %s289, 128
        $region48: #{tpu_custom_call.1} parent=43 // pred_fallthru
          _
      $region44: #{tpu_custom_call.1} parent=5 // pred_fallthru
        _
    $region6: #{tpu_custom_call.1} parent=1 // loop_footer
      %s15 = sadd.s32 1, %s11
    $region7: #{tpu_custom_call.1} parent=1 // loop_footer_branch
      %10 = sbr.rel target = $region3
    $region8: #{tpu_custom_call.1} parent=1 // loop_exit
      _
    %294 = vsyncpa [#allocation6], 1
    %s295 = scalar_lea.sflag [#allocation6], 1
    %296 = vsyncpa %s295, 1

</llo_original>
